<compile_context>
chip_gen: v7x
topology: tpu7x:2x2x1
jax: 0.10.0
libtpu: 0.0.40
codegen_flags: <defaults>
</compile_context>

<pallas_src>
import functools

import jax
import jax.numpy as jnp
from jax.experimental import pallas as pl
from jax.experimental.pallas import tpu as pltpu


def _conv_bn_relu_kernel(patch_ref, w_ref, bias_ref, out_ref):
    """One output tile: (TM, Kp) @ (Kp, Cp) -> (TM, Cp), + bias, ReLU.

    patch_ref: (TM, Kp)  im2col rows for this M-tile (K padded to lanes)
    w_ref:     (Kp, Cp)  BN-scale-folded weights (padded to lanes)
    bias_ref:  (1,  Cp)  folded BN bias
    out_ref:   (TM, Cp)
    """
    y = jnp.dot(patch_ref[...], w_ref[...], preferred_element_type=jnp.float32)
    y = y + bias_ref[...]
    out_ref[...] = jnp.maximum(y, 0.0).astype(out_ref.dtype)


def _round_up(x, m):
    return ((x + m - 1) // m) * m


def conv_bn_relu(x_nchw, weight, gamma, beta, running_mean, running_var,
                 *, k, stride=1, eps=1e-5, tm=256):
    """Equivalent of convolution(k, C_in, C_out, stride, with_bn=True).forward (eval BN).

    x_nchw : (N, C_in, H, W)     float32
    weight : (C_out, C_in, k, k) PyTorch Conv2d layout (no conv bias when BN is used)
    """
    N, C_in, H, W = x_nchw.shape
    C_out = weight.shape[0]
    pad = (k - 1) // 2                    # 'same'-style padding for odd k (matches module)
    Ho = (H + 2 * pad - k) // stride + 1
    Wo = (W + 2 * pad - k) // stride + 1

    # ---- glue: layout only (NCHW -> NHWC, spatial pad, im2col) -------------
    x = jnp.transpose(x_nchw, (0, 2, 3, 1))                       # NHWC
    x_pad = jnp.pad(x, ((0, 0), (pad, pad), (pad, pad), (0, 0)))

    M = N * Ho * Wo
    K = k * k * C_in

    cols = []
    for ki in range(k):
        for kj in range(k):
            sl = x_pad[:, ki:ki + Ho * stride:stride, kj:kj + Wo * stride:stride, :]
            cols.append(sl.reshape(M, C_in))
    patches = jnp.concatenate(cols, axis=-1)                      # (M, K), col = (ki*k+kj)*C_in + c

    # weight (C_out, C_in, k, k) -> (k, k, C_in, C_out) -> (K, C_out); row order matches patches.
    w2d = jnp.transpose(weight, (2, 3, 1, 0)).reshape(K, C_out).astype(jnp.float32)

    # Fold eval-mode BN: scale into the weights, bias added in the kernel epilogue.
    scale = (gamma / jnp.sqrt(running_var + eps)).astype(jnp.float32)   # (C_out,)
    bias = (beta - running_mean * scale).astype(jnp.float32)            # (C_out,)
    w_folded = w2d * scale[None, :]

    # ---- lane-dense padding + M tiling --------------------------------------
    tm = max(8, _round_up(min(tm, max(M, 8)), 8))
    Mp = _round_up(M, tm)
    Kp = _round_up(K, 128)
    Cp = _round_up(C_out, 128)

    patches_p = jnp.zeros((Mp, Kp), jnp.float32).at[:M, :K].set(patches)
    w_p = jnp.zeros((Kp, Cp), jnp.float32).at[:K, :C_out].set(w_folded)
    bias_p = jnp.zeros((1, Cp), jnp.float32).at[0, :C_out].set(bias)

    grid_m = Mp // tm

    out_p = pl.pallas_call(
        _conv_bn_relu_kernel,
        out_shape=jax.ShapeDtypeStruct((Mp, Cp), x.dtype),
        grid_spec=pltpu.PrefetchScalarGridSpec(
            num_scalar_prefetch=0,
            grid=(grid_m,),
            in_specs=[
                pl.BlockSpec((tm, Kp), lambda m: (m, 0)),   # patch tile
                pl.BlockSpec((Kp, Cp), lambda m: (0, 0)),   # weights (resident)
                pl.BlockSpec((1, Cp), lambda m: (0, 0)),    # folded BN bias
            ],
            out_specs=pl.BlockSpec((tm, Cp), lambda m: (m, 0)),
        ),
        compiler_params=pltpu.CompilerParams(
            dimension_semantics=("parallel",),
            vmem_limit_bytes=32 * 1024 * 1024,
        ),
    )(patches_p, w_p, bias_p)

    out = out_p[:M, :C_out].reshape(N, Ho, Wo, C_out)
    return jnp.transpose(out, (0, 3, 1, 2))                       # back to NCHW


def _reference(x_nchw, weight, gamma, beta, running_mean, running_var,
               *, k, stride=1, eps=1e-5):
    pad = (k - 1) // 2
    conv = jax.lax.conv_general_dilated(
        x_nchw, weight,
        window_strides=(stride, stride),
        padding=((pad, pad), (pad, pad)),
        dimension_numbers=("NCHW", "OIHW", "NCHW"),
    )
    scale = gamma / jnp.sqrt(running_var + eps)
    bias = beta - running_mean * scale
    bn = conv * scale[None, :, None, None] + bias[None, :, None, None]
    return jnp.maximum(bn, 0.0)


if __name__ == "__main__":
    # convolution(k=3, inp_dim=4, out_dim=8, stride=1, with_bn=True)
    k, C_in, C_out, stride = 3, 4, 8, 1
    N, H, W = 2, 16, 16

    key = jax.random.PRNGKey(0)
    kx, kw, kg, kb, km, kv = jax.random.split(key, 6)

    x = jax.random.normal(kx, (N, C_in, H, W), dtype=jnp.float32)
    weight = jax.random.normal(kw, (C_out, C_in, k, k), dtype=jnp.float32) * 0.1
    gamma = 1.0 + 0.1 * jax.random.normal(kg, (C_out,), dtype=jnp.float32)
    beta = 0.1 * jax.random.normal(kb, (C_out,), dtype=jnp.float32)
    running_mean = 0.1 * jax.random.normal(km, (C_out,), dtype=jnp.float32)
    running_var = jnp.abs(1.0 + 0.1 * jax.random.normal(kv, (C_out,), dtype=jnp.float32))

    fn = jax.jit(functools.partial(conv_bn_relu, k=k, stride=stride))
    out = fn(x, weight, gamma, beta, running_mean, running_var)
    out = jax.block_until_ready(out)

    ref = _reference(x, weight, gamma, beta, running_mean, running_var,
                     k=k, stride=stride)
    assert out.shape == (N, C_out, H, W)
    assert jnp.allclose(out, ref, atol=1e-4, rtol=1e-4)

    print("KERNEL_OK")
</pallas_src>

<mosaic_0001>
module attributes {stable_mosaic.version = 11 : i64} {
  func.func @_conv_bn_relu_kernel(%arg0: i32, %arg1: memref<256x128xf32, #tpu.memory_space<vmem>>, %arg2: memref<128x128xf32, #tpu.memory_space<vmem>>, %arg3: memref<1x128xf32, #tpu.memory_space<vmem>>, %arg4: memref<256x128xf32, #tpu.memory_space<vmem>>) attributes {dimension_semantics = [#tpu.dimension_semantics<parallel>], iteration_bounds = array<i64: 2>, scalar_prefetch = 0 : i64, scratch_operands = 0 : i64, tpu.core_type = #tpu.core_type<tc>, window_params = [{transform_indices = @transform_0, window_bounds = array<i64: 256, 128>}, {pipeline_mode = #tpu.pipeline_mode<synchronous>, transform_indices = @transform_1, window_bounds = array<i64: 128, 128>}, {pipeline_mode = #tpu.pipeline_mode<synchronous>, transform_indices = @transform_2, window_bounds = array<i64: 1, 128>}, {transform_indices = @transform_3, window_bounds = array<i64: 256, 128>}]} {
    %c0 = arith.constant 0 : index
    %c0_0 = arith.constant 0 : index
    %0 = vector.load %arg1[%c0, %c0_0] : memref<256x128xf32, #tpu.memory_space<vmem>>, vector<256x128xf32>
    %c0_1 = arith.constant 0 : index
    %c0_2 = arith.constant 0 : index
    %1 = vector.load %arg2[%c0_1, %c0_2] : memref<128x128xf32, #tpu.memory_space<vmem>>, vector<128x128xf32>
    %cst = arith.constant dense<0.000000e+00> : vector<256x128xf32>
    %2 = tpu.matmul %0, %1, %cst {dimension_numbers = #tpu.dot_dimension_numbers<[1], [0], [0], [1], [0, 0, 1, 1], [], []>} : vector<256x128xf32>, vector<128x128xf32>, vector<256x128xf32> -> vector<256x128xf32>
    %c0_3 = arith.constant 0 : index
    %c0_4 = arith.constant 0 : index
    %3 = vector.load %arg3[%c0_3, %c0_4] : memref<1x128xf32, #tpu.memory_space<vmem>>, vector<1x128xf32>
    %4 = vector.broadcast %3 : vector<1x128xf32> to vector<256x128xf32>
    %5 = arith.addf %2, %4 : vector<256x128xf32>
    %cst_5 = arith.constant 0.000000e+00 : f32
    %6 = vector.broadcast %cst_5 : f32 to vector<256x128xf32>
    %7 = arith.maximumf %5, %6 : vector<256x128xf32>
    %c0_6 = arith.constant 0 : index
    %c0_7 = arith.constant 0 : index
    %8 = vector.load %arg4[%c0_6, %c0_7] : memref<256x128xf32, #tpu.memory_space<vmem>>, vector<256x128xf32>
    tpu.vector_store %arg4[%c0_6, %c0_7], %7 {strides = array<i32>} : memref<256x128xf32, #tpu.memory_space<vmem>>, vector<256x128xf32>,
    return
  }
  func.func @transform_0(%arg0: i32) -> (i32, i32) {
    %c0_i32 = arith.constant 0 : i32
    %c0_i32_0 = arith.constant 0 : i32
    return %arg0, %c0_i32 : i32, i32
  }
  func.func @transform_1(%arg0: i32) -> (i32, i32) {
    %c0_i32 = arith.constant 0 : i32
    %c0_i32_0 = arith.constant 0 : i32
    %c0_i32_1 = arith.constant 0 : i32
    return %c0_i32, %c0_i32_0 : i32, i32
  }
  func.func @transform_2(%arg0: i32) -> (i32, i32) {
    %c0_i32 = arith.constant 0 : i32
    %c0_i32_0 = arith.constant 0 : i32
    %c0_i32_1 = arith.constant 0 : i32
    return %c0_i32, %c0_i32_0 : i32, i32
  }
  func.func @transform_3(%arg0: i32) -> (i32, i32) {
    %c0_i32 = arith.constant 0 : i32
    %c0_i32_0 = arith.constant 0 : i32
    return %arg0, %c0_i32 : i32, i32
  }
}

</mosaic_0001>

<llo_original>
// kernel: conv_bn_relu.1
$region0: #{conv_bn_relu.1}
  #allocation0 [shape = 'u32[]', space=smem, size = 0x4, offset = 0x4, fixed_abs, tag = 'smem constant byte address 0x4 - core index']
  #allocation1 [shape = 'u32[144,128]{1,0:T(1,128)}', space=vmem, size = 0x12000, scoped, tag = 'internal scratch']
  %s0 = inlined_call_operand.vmem [shape: f32[512,128], index: 0, kind: input, shape index: {}]
  %s1 = inlined_call_operand.vmem [shape: f32[128,128], index: 1, kind: input, shape index: {}]
  %s2 = inlined_call_operand.vmem [shape: f32[1,128], index: 2, kind: input, shape index: {}]
  %s3 = inlined_call_operand.vmem [shape: f32[512,128], index: 3, kind: output, shape index: {}]
  %s4 = sld [smem:[#allocation0]]
  $region45: #{conv_bn_relu.1} parent=0
    _
  %s6 = ssub.s32 1, %s4
  %s7 = scalar_select 0, %s6, %s4
  loop: start=0, step=1, limit=4
  $region2: #{conv_bn_relu.1} parent=0 // loop_pre_header
    _
  $region3: #{conv_bn_relu.1} parent=0 // loop_header
    %s9 = sphi 0, %s13
    %p10 = scmp.ge.s32.totalorder %s9, 4
    %s19 = sphi 0, %s21
    %s22 = sphi 0, %s19
    %s23 = sphi 0, %s22
    %s39 = sphi 0, %s23
    %s43 = sphi 0, %s43
    %s45 = sphi 0, %s43
    %s46 = sphi 0, %s45
    %s60 = sphi 0, %s46
    %s64 = sphi 0, %s64
    %s66 = sphi 0, %s64
    %s67 = sphi 0, %s66
    %s81 = sphi 0, %s67
    %s87 = sphi 0, %s89
    %s90 = sphi 0, %s87
    %s91 = sphi 0, %s90
    %s107 = sphi 0, %s91
  $region4: #{conv_bn_relu.1} parent=0 // loop_header_branch
    %12 = sbr.rel (%p10) target = $region8
  $region5: #{conv_bn_relu.1} parent=0 // loop_body
    %s14 = ssub.s32 %s9, 1
    %s15 = ssub.s32 %s9, 2
    %s16 = sadd.s32 %s9, 1
    %s17 = ssub.s32 %s9, %s16
    %p18 = scmp.eq.s32.totalorder %s17, 0
    %s20 = sadd.s32 %s19, 1
    %s21 = scalar_select %p18, %s19, %s20
    %p24 = pneg %p18
    %p25 = scmp.eq.s32.totalorder %s9, 1
    %p26 = por %p24, %p25
    %p27 = scmp.ne.s32.totalorder %s19, %s22
    %p28 = scmp.eq.s32.totalorder %s9, 0
    %p29 = por %p27, %p28
    %p30 = scmp.ne.s32.totalorder %s19, %s22
    %p31 = scmp.eq.s32.totalorder %s14, 1
    %p32 = por %p30, %p31
    %p33 = scmp.ne.s32.totalorder %s22, %s23
    %p34 = scmp.eq.s32.totalorder %s14, 0
    %p35 = por %p33, %p34
    %p36 = scmp.ne.s32.totalorder %s22, %s23
    %p37 = scmp.eq.s32.totalorder %s15, 1
    %p38 = por %p36, %p37
    %p40 = scmp.ne.s32.totalorder %s23, %s39
    %p41 = scmp.eq.s32.totalorder %s15, 0
    %p42 = por %p40, %p41
    %s44 = sadd.s32 %s43, 1
    %p47 = scmp.eq.s32.totalorder %s9, 1
    %p48 = scmp.ne.s32.totalorder %s43, %s45
    %p49 = scmp.eq.s32.totalorder %s9, 0
    %p50 = por %p48, %p49
    %p51 = scmp.ne.s32.totalorder %s43, %s45
    %p52 = scmp.eq.s32.totalorder %s14, 1
    %p53 = por %p51, %p52
    %p54 = scmp.ne.s32.totalorder %s45, %s46
    %p55 = scmp.eq.s32.totalorder %s14, 0
    %p56 = por %p54, %p55
    %p57 = scmp.ne.s32.totalorder %s45, %s46
    %p58 = scmp.eq.s32.totalorder %s15, 1
    %p59 = por %p57, %p58
    %p61 = scmp.ne.s32.totalorder %s46, %s60
    %p62 = scmp.eq.s32.totalorder %s15, 0
    %p63 = por %p61, %p62
    %s65 = sadd.s32 %s64, 1
    %p68 = scmp.eq.s32.totalorder %s9, 1
    %p69 = scmp.ne.s32.totalorder %s64, %s66
    %p70 = scmp.eq.s32.totalorder %s9, 0
    %p71 = por %p69, %p70
    %p72 = scmp.ne.s32.totalorder %s64, %s66
    %p73 = scmp.eq.s32.totalorder %s14, 1
    %p74 = por %p72, %p73
    %p75 = scmp.ne.s32.totalorder %s66, %s67
    %p76 = scmp.eq.s32.totalorder %s14, 0
    %p77 = por %p75, %p76
    %p78 = scmp.ne.s32.totalorder %s66, %s67
    %p79 = scmp.eq.s32.totalorder %s15, 1
    %p80 = por %p78, %p79
    %p82 = scmp.ne.s32.totalorder %s67, %s81
    %p83 = scmp.eq.s32.totalorder %s15, 0
    %p84 = por %p82, %p83
    %s85 = ssub.s32 %s9, %s16
    %p86 = scmp.eq.s32.totalorder %s85, 0
    %s88 = sadd.s32 %s87, 1
    %s89 = scalar_select %p86, %s87, %s88
    %p92 = pneg %p86
    %p93 = scmp.eq.s32.totalorder %s9, 1
    %p94 = por %p92, %p93
    %p95 = scmp.ne.s32.totalorder %s87, %s90
    %p96 = scmp.eq.s32.totalorder %s9, 0
    %p97 = por %p95, %p96
    %p98 = scmp.ne.s32.totalorder %s87, %s90
    %p99 = scmp.eq.s32.totalorder %s14, 1
    %p100 = por %p98, %p99
    %p101 = scmp.ne.s32.totalorder %s90, %s91
    %p102 = scmp.eq.s32.totalorder %s14, 0
    %p103 = por %p101, %p102
    %p104 = scmp.ne.s32.totalorder %s90, %s91
    %p105 = scmp.eq.s32.totalorder %s15, 1
    %p106 = por %p104, %p105
    %p108 = scmp.ne.s32.totalorder %s91, %s107
    %p109 = scmp.eq.s32.totalorder %s15, 0
    %p110 = por %p108, %p109
    %p111 = scmp.le.s32.totalorder 1, %s9
    %p112 = scmp.lt.s32.totalorder %s9, 3
    %p113 = pnand %p111, %p112
    %p114 = pneg %p113
    // Predicated region
    $region9: #{conv_bn_relu.1} parent=5 // pred_check
      _
    $region10: #{conv_bn_relu.1} parent=5 // pred_check_branch
      %116 = sbr.rel (%p113) target = $region12
    $region11: #{conv_bn_relu.1} parent=5 // pred_region
      %s117 = ssub.s32 %s9, 1
      // Predicated region
      $region13: #{conv_bn_relu.1} parent=11 // pred_check
        %p118 = pneg %p56
      $region14: #{conv_bn_relu.1} parent=11 // pred_check_branch
        %120 = sbr.rel (%p118) target = $region16
      $region15: #{conv_bn_relu.1} parent=11 // pred_region
        _
      $region16: #{conv_bn_relu.1} parent=11 // pred_fallthru
        _
      // Predicated region
      $region17: #{conv_bn_relu.1} parent=11 // pred_check
        %p121 = pneg %p77
      $region18: #{conv_bn_relu.1} parent=11 // pred_check_branch
        %123 = sbr.rel (%p121) target = $region20
      $region19: #{conv_bn_relu.1} parent=11 // pred_region
        _
      $region20: #{conv_bn_relu.1} parent=11 // pred_fallthru
        _
    $region12: #{conv_bn_relu.1} parent=5 // pred_fallthru
      _
    %p124 = scmp.lt.s32.totalorder %s9, 2
    // Predicated region
    $region21: #{conv_bn_relu.1} parent=5 // pred_check
      %p125 = pneg %p124
    $region22: #{conv_bn_relu.1} parent=5 // pred_check_branch
      %127 = sbr.rel (%p125) target = $region24
    $region23: #{conv_bn_relu.1} parent=5 // pred_region
      // Predicated region
      $region25: #{conv_bn_relu.1} parent=23 // pred_check
        %p128 = pneg %p29
      $region26: #{conv_bn_relu.1} parent=23 // pred_check_branch
        %130 = sbr.rel (%p128) target = $region28
      $region27: #{conv_bn_relu.1} parent=23 // pred_region
        %s131 = smul.u32 32, %s9
        %p132 = scmp.lt.s32.totalorder %s131, 63
        %s133 = scalar_select %p132, %s131, 63
        %s134 = smul.addr %s133, 8
        %s135 = scalar_lea.vmem %s0, %s134
        %s136 = smul.u32 32, %s9
      $region28: #{conv_bn_relu.1} parent=23 // pred_fallthru
        _
    $region24: #{conv_bn_relu.1} parent=5 // pred_fallthru
      _
    %p137 = scmp.le.s32.totalorder 1, %s9
    %p138 = scmp.lt.s32.totalorder %s9, 3
    %p139 = pnand %p137, %p138
    %p140 = pneg %p139
    // Predicated region
    $region29: #{conv_bn_relu.1} parent=5 // pred_check
      _
    $region30: #{conv_bn_relu.1} parent=5 // pred_check_branch
      %142 = sbr.rel (%p139) target = $region32
    $region31: #{conv_bn_relu.1} parent=5 // pred_region
      %s143 = ssub.s32 %s9, 1
      %s144 = smul.u32 32, %s14
      %p145 = scmp.lt.s32.totalorder %s144, 63
      %s146 = scalar_select %p145, %s144, 63
      %s147 = smul.addr %s146, 8
      %s148 = scalar_lea.vmem %s0, %s147
      %p149 = pneg %p35
      %p150 = pneg %p32
      %p151 = pneg %p56
      %p152 = pneg %p53
      %p153 = pneg %p77
      %p154 = pneg %p74
      %p155 = pneg %p103
      %p156 = pneg %p100
      %s157 = smul.u32 32, %s14
      %p158 = scmp.lt.s32.totalorder %s157, 63
      %s159 = scalar_select %p158, %s157, 63
      %s160 = smul.addr %s159, 8
      %s161 = scalar_lea.vmem %s3, %s160
      %s162 = smul.u32 32, %s14
      %p163 = scmp.lt.s32.totalorder %s162, 63
      %s164 = scalar_select %p163, %s162, 63
      %s165 = smul.addr %s164, 8
      %s166 = scalar_lea.vmem %s0, %s165
      %s167 = smul.u32 32, %s14
      %s168 = smul.u32 32, %s14
      %p169 = scmp.lt.s32.totalorder %s168, 63
      %s170 = scalar_select %p169, %s168, 63
      %s171 = smul.addr %s170, 8
      %s172 = scalar_lea.vmem %s3, %s171
      %s173 = smul.u32 32, %s14
      %v174 = vld [vmem:[%s166] sm:$0xff]
      %v175 = vld [vmem:[%s166 + $0x8] sm:$0xff]
      %v176 = vld [vmem:[%s166 + $0x10] sm:$0xff]
      %v177 = vld [vmem:[%s166 + $0x18] sm:$0xff]
      %v178 = vld [vmem:[%s166 + $0x20] sm:$0xff]
      %v179 = vld [vmem:[%s166 + $0x28] sm:$0xff]
      %v180 = vld [vmem:[%s166 + $0x30] sm:$0xff]
      %v181 = vld [vmem:[%s166 + $0x38] sm:$0xff]
      %v182 = vld [vmem:[%s166 + $0x40] sm:$0xff]
      %v183 = vld [vmem:[%s166 + $0x48] sm:$0xff]
      %v184 = vld [vmem:[%s166 + $0x50] sm:$0xff]
      %v185 = vld [vmem:[%s166 + $0x58] sm:$0xff]
      %v186 = vld [vmem:[%s166 + $0x60] sm:$0xff]
      %v187 = vld [vmem:[%s166 + $0x68] sm:$0xff]
      %v188 = vld [vmem:[%s166 + $0x70] sm:$0xff]
      %v189 = vld [vmem:[%s166 + $0x78] sm:$0xff]
      %v190 = vld [vmem:[%s166 + $0x80] sm:$0xff]
      %v191 = vld [vmem:[%s166 + $0x88] sm:$0xff]
      %v192 = vld [vmem:[%s166 + $0x90] sm:$0xff]
      %v193 = vld [vmem:[%s166 + $0x98] sm:$0xff]
      %v194 = vld [vmem:[%s166 + $0xa0] sm:$0xff]
      %v195 = vld [vmem:[%s166 + $0xa8] sm:$0xff]
      %v196 = vld [vmem:[%s166 + $0xb0] sm:$0xff]
      %v197 = vld [vmem:[%s166 + $0xb8] sm:$0xff]
      %v198 = vld [vmem:[%s166 + $0xc0] sm:$0xff]
      %v199 = vld [vmem:[%s166 + $0xc8] sm:$0xff]
      %v200 = vld [vmem:[%s166 + $0xd0] sm:$0xff]
      %v201 = vld [vmem:[%s166 + $0xd8] sm:$0xff]
      %v202 = vld [vmem:[%s166 + $0xe0] sm:$0xff]
      %v203 = vld [vmem:[%s166 + $0xe8] sm:$0xff]
      %v204 = vld [vmem:[%s166 + $0xf0] sm:$0xff]
      %v205 = vld [vmem:[%s166 + $0xf8] sm:$0xff]
      %v206 = vld [vmem:[%s1] sm:$0xff]
      %v207 = vld [vmem:[%s1 + $0x8] sm:$0xff]
      %v208 = vld [vmem:[%s1 + $0x10] sm:$0xff]
      %v209 = vld [vmem:[%s1 + $0x18] sm:$0xff]
      %v210 = vld [vmem:[%s1 + $0x20] sm:$0xff]
      %v211 = vld [vmem:[%s1 + $0x28] sm:$0xff]
      %v212 = vld [vmem:[%s1 + $0x30] sm:$0xff]
      %v213 = vld [vmem:[%s1 + $0x38] sm:$0xff]
      %v214 = vld [vmem:[%s1 + $0x40] sm:$0xff]
      %v215 = vld [vmem:[%s1 + $0x48] sm:$0xff]
      %v216 = vld [vmem:[%s1 + $0x50] sm:$0xff]
      %v217 = vld [vmem:[%s1 + $0x58] sm:$0xff]
      %v218 = vld [vmem:[%s1 + $0x60] sm:$0xff]
      %v219 = vld [vmem:[%s1 + $0x68] sm:$0xff]
      %v220 = vld [vmem:[%s1 + $0x70] sm:$0xff]
      %v221 = vld [vmem:[%s1 + $0x78] sm:$0xff]
      %v222 = vld [vmem:[%s2] sm:$0x1]
      %v224 = vlaneseq
      %v225 = vshrl.u32 %v224, 7
      %v226 = vsub.s32 0, %v225
      %v227 = vrot.slane %v222, %v226
      %229 = vmatprep.subr.mxu0 0.0
      %230 = vmatpush1.msra.mxu0 %v206
      %231 = vmatprep.subr.mxu0 0.0
      %232 = vmatpush1.msra.mxu0 %v207
      %233 = vmatprep.subr.mxu0 0.0
      %234 = vmatpush1.msra.mxu0 %v208
      %235 = vmatprep.subr.mxu0 0.0
      %236 = vmatpush1.msra.mxu0 %v209
      %237 = vmatprep.subr.mxu0 0.0
      %238 = vmatpush1.msra.mxu0 %v210
      %239 = vmatprep.subr.mxu0 0.0
      %240 = vmatpush1.msra.mxu0 %v211
      %241 = vmatprep.subr.mxu0 0.0
      %242 = vmatpush1.msra.mxu0 %v212
      %243 = vmatprep.subr.mxu0 0.0
      %244 = vmatpush1.msra.mxu0 %v213
      %245 = vmatprep.subr.mxu0 0.0
      %246 = vmatpush1.msra.mxu0 %v214
      %247 = vmatprep.subr.mxu0 0.0
      %248 = vmatpush1.msra.mxu0 %v215
      %249 = vmatprep.subr.mxu0 0.0
      %250 = vmatpush1.msra.mxu0 %v216
      %251 = vmatprep.subr.mxu0 0.0
      %252 = vmatpush1.msra.mxu0 %v217
      %253 = vmatprep.subr.mxu0 0.0
      %254 = vmatpush1.msra.mxu0 %v218
      %255 = vmatprep.subr.mxu0 0.0
      %256 = vmatpush1.msra.mxu0 %v219
      %257 = vmatprep.subr.mxu0 0.0
      %258 = vmatpush1.msra.mxu0 %v220
      %259 = vmatprep.subr.mxu0 0.0
      %260 = vmatpush1.msra.mxu0 %v221
      %261 = vmatprep.subr.mxu0 0.0
      %262 = vmatpush1.msra.mxu0 0.0
      %263 = vmatprep.subr.mxu0 0.0
      %264 = vmatpush1.msra.mxu0 0.0
      %265 = vmatprep.subr.mxu0 0.0
      %266 = vmatpush1.msra.mxu0 0.0
      %267 = vmatprep.subr.mxu0 0.0
      %268 = vmatpush1.msra.mxu0 0.0
      %269 = vmatprep.subr.mxu0 0.0
      %270 = vmatpush1.msra.mxu0 0.0
      %271 = vmatprep.subr.mxu0 0.0
      %272 = vmatpush1.msra.mxu0 0.0
      %273 = vmatprep.subr.mxu0 0.0
      %274 = vmatpush1.msra.mxu0 0.0
      %275 = vmatprep.subr.mxu0 0.0
      %276 = vmatpush1.msra.mxu0 0.0
      %277 = vmatprep.subr.mxu0 0.0
      %278 = vmatpush1.msra.mxu0 0.0
      %279 = vmatprep.subr.mxu0 0.0
      %280 = vmatpush1.msra.mxu0 0.0
      %281 = vmatprep.subr.mxu0 0.0
      %282 = vmatpush1.msra.mxu0 0.0
      %283 = vmatprep.subr.mxu0 0.0
      %284 = vmatpush1.msra.mxu0 0.0
      %285 = vmatprep.subr.mxu0 0.0
      %286 = vmatpush1.msra.mxu0 0.0
      %287 = vmatprep.subr.mxu0 0.0
      %288 = vmatpush1.msra.mxu0 0.0
      %289 = vmatprep.subr.mxu0 0.0
      %290 = vmatpush1.msra.mxu0 0.0
      %291 = vmatprep.subr.mxu0 0.0
      %292 = vmatpush1.msra.mxu0 0.0
      %293 = vmatprep.mubr.f32.mxu0 0.0
      %294 = vmatmul.mubr.f32.gmra.mrb[0].mxu0 %v174
      %v295 = vpop.f32.mrb[0].mxu0
      %v296 = vadd.f32 %v227, %v295
      %v297 = vpop.f32.mrb[0].mxu0
      %298 = vmatprep.mubr.f32.mxu0 0.0
      %299 = vmatmul.mubr.f32.gmra.mrb[0].mxu0 %v175
      %v300 = vpop.f32.mrb[0].mxu0
      %v301 = vadd.f32 %v227, %v300
      %v302 = vpop.f32.mrb[0].mxu0
      %303 = vmatprep.mubr.f32.mxu0 0.0
      %304 = vmatmul.mubr.f32.gmra.mrb[0].mxu0 %v176
      %v305 = vpop.f32.mrb[0].mxu0
      %v306 = vadd.f32 %v227, %v305
      %v307 = vpop.f32.mrb[0].mxu0
      %308 = vmatprep.mubr.f32.mxu0 0.0
      %309 = vmatmul.mubr.f32.gmra.mrb[0].mxu0 %v177
      %v310 = vpop.f32.mrb[0].mxu0
      %v311 = vadd.f32 %v227, %v310
      %v312 = vpop.f32.mrb[0].mxu0
      %313 = vmatprep.mubr.f32.mxu0 0.0
      %314 = vmatmul.mubr.f32.gmra.mrb[0].mxu0 %v178
      %v315 = vpop.f32.mrb[0].mxu0
      %v316 = vadd.f32 %v227, %v315
      %v317 = vpop.f32.mrb[0].mxu0
      %318 = vmatprep.mubr.f32.mxu0 0.0
      %319 = vmatmul.mubr.f32.gmra.mrb[0].mxu0 %v179
      %v320 = vpop.f32.mrb[0].mxu0
      %v321 = vadd.f32 %v227, %v320
      %v322 = vpop.f32.mrb[0].mxu0
      %323 = vmatprep.mubr.f32.mxu0 0.0
      %324 = vmatmul.mubr.f32.gmra.mrb[0].mxu0 %v180
      %v325 = vpop.f32.mrb[0].mxu0
      %v326 = vadd.f32 %v227, %v325
      %v327 = vpop.f32.mrb[0].mxu0
      %328 = vmatprep.mubr.f32.mxu0 0.0
      %329 = vmatmul.mubr.f32.gmra.mrb[0].mxu0 %v181
      %v330 = vpop.f32.mrb[0].mxu0
      %v331 = vadd.f32 %v227, %v330
      %v332 = vpop.f32.mrb[0].mxu0
      %333 = vmatprep.mubr.f32.mxu0 0.0
      %334 = vmatmul.mubr.f32.gmra.mrb[0].mxu0 %v182
      %v335 = vpop.f32.mrb[0].mxu0
      %v336 = vadd.f32 %v227, %v335
      %v337 = vpop.f32.mrb[0].mxu0
      %338 = vmatprep.mubr.f32.mxu0 0.0
      %339 = vmatmul.mubr.f32.gmra.mrb[0].mxu0 %v183
      %v340 = vpop.f32.mrb[0].mxu0
      %v341 = vadd.f32 %v227, %v340
      %v342 = vpop.f32.mrb[0].mxu0
      %343 = vmatprep.mubr.f32.mxu0 0.0
      %344 = vmatmul.mubr.f32.gmra.mrb[0].mxu0 %v184
      %v345 = vpop.f32.mrb[0].mxu0
      %v346 = vadd.f32 %v227, %v345
      %v347 = vpop.f32.mrb[0].mxu0
      %348 = vmatprep.mubr.f32.mxu0 0.0
      %349 = vmatmul.mubr.f32.gmra.mrb[0].mxu0 %v185
      %v350 = vpop.f32.mrb[0].mxu0
      %v351 = vadd.f32 %v227, %v350
      %v352 = vpop.f32.mrb[0].mxu0
      %353 = vmatprep.mubr.f32.mxu0 0.0
      %354 = vmatmul.mubr.f32.gmra.mrb[0].mxu0 %v186
      %v355 = vpop.f32.mrb[0].mxu0
      %v356 = vadd.f32 %v227, %v355
      %v357 = vpop.f32.mrb[0].mxu0
      %358 = vmatprep.mubr.f32.mxu0 0.0
      %359 = vmatmul.mubr.f32.gmra.mrb[0].mxu0 %v187
      %v360 = vpop.f32.mrb[0].mxu0
      %v361 = vadd.f32 %v227, %v360
      %v362 = vpop.f32.mrb[0].mxu0
      %363 = vmatprep.mubr.f32.mxu0 0.0
      %364 = vmatmul.mubr.f32.gmra.mrb[0].mxu0 %v188
      %v365 = vpop.f32.mrb[0].mxu0
      %v366 = vadd.f32 %v227, %v365
      %v367 = vpop.f32.mrb[0].mxu0
      %368 = vmatprep.mubr.f32.mxu0 0.0
      %369 = vmatmul.mubr.f32.gmra.mrb[0].mxu0 %v189
      %v370 = vpop.f32.mrb[0].mxu0
      %v371 = vadd.f32 %v227, %v370
      %v372 = vpop.f32.mrb[0].mxu0
      %373 = vmatprep.mubr.f32.mxu0 0.0
      %374 = vmatmul.mubr.f32.gmra.mrb[0].mxu0 %v190
      %v375 = vpop.f32.mrb[0].mxu0
      %v376 = vadd.f32 %v227, %v375
      %v377 = vpop.f32.mrb[0].mxu0
      %378 = vmatprep.mubr.f32.mxu0 0.0
      %379 = vmatmul.mubr.f32.gmra.mrb[0].mxu0 %v191
      %v380 = vpop.f32.mrb[0].mxu0
      %v381 = vadd.f32 %v227, %v380
      %v382 = vpop.f32.mrb[0].mxu0
      %383 = vmatprep.mubr.f32.mxu0 0.0
      %384 = vmatmul.mubr.f32.gmra.mrb[0].mxu0 %v192
      %v385 = vpop.f32.mrb[0].mxu0
      %v386 = vadd.f32 %v227, %v385
      %v387 = vpop.f32.mrb[0].mxu0
      %388 = vmatprep.mubr.f32.mxu0 0.0
      %389 = vmatmul.mubr.f32.gmra.mrb[0].mxu0 %v193
      %v390 = vpop.f32.mrb[0].mxu0
      %v391 = vadd.f32 %v227, %v390
      %v392 = vpop.f32.mrb[0].mxu0
      %393 = vmatprep.mubr.f32.mxu0 0.0
      %394 = vmatmul.mubr.f32.gmra.mrb[0].mxu0 %v194
      %v395 = vpop.f32.mrb[0].mxu0
      %v396 = vadd.f32 %v227, %v395
      %v397 = vpop.f32.mrb[0].mxu0
      %398 = vmatprep.mubr.f32.mxu0 0.0
      %399 = vmatmul.mubr.f32.gmra.mrb[0].mxu0 %v195
      %v400 = vpop.f32.mrb[0].mxu0
      %v401 = vadd.f32 %v227, %v400
      %v402 = vpop.f32.mrb[0].mxu0
      %403 = vmatprep.mubr.f32.mxu0 0.0
      %404 = vmatmul.mubr.f32.gmra.mrb[0].mxu0 %v196
      %v405 = vpop.f32.mrb[0].mxu0
      %v406 = vadd.f32 %v227, %v405
      %v407 = vpop.f32.mrb[0].mxu0
      %408 = vmatprep.mubr.f32.mxu0 0.0
      %409 = vmatmul.mubr.f32.gmra.mrb[0].mxu0 %v197
      %v410 = vpop.f32.mrb[0].mxu0
      %v411 = vadd.f32 %v227, %v410
      %v412 = vpop.f32.mrb[0].mxu0
      %413 = vmatprep.mubr.f32.mxu0 0.0
      %414 = vmatmul.mubr.f32.gmra.mrb[0].mxu0 %v198
      %v415 = vpop.f32.mrb[0].mxu0
      %v416 = vadd.f32 %v227, %v415
      %v417 = vpop.f32.mrb[0].mxu0
      %418 = vmatprep.mubr.f32.mxu0 0.0
      %419 = vmatmul.mubr.f32.gmra.mrb[0].mxu0 %v199
      %v420 = vpop.f32.mrb[0].mxu0
      %v421 = vadd.f32 %v227, %v420
      %v422 = vpop.f32.mrb[0].mxu0
      %423 = vmatprep.mubr.f32.mxu0 0.0
      %424 = vmatmul.mubr.f32.gmra.mrb[0].mxu0 %v200
      %v425 = vpop.f32.mrb[0].mxu0
      %v426 = vadd.f32 %v227, %v425
      %v427 = vpop.f32.mrb[0].mxu0
      %428 = vmatprep.mubr.f32.mxu0 0.0
      %429 = vmatmul.mubr.f32.gmra.mrb[0].mxu0 %v201
      %v430 = vpop.f32.mrb[0].mxu0
      %v431 = vadd.f32 %v227, %v430
      %v432 = vpop.f32.mrb[0].mxu0
      %433 = vmatprep.mubr.f32.mxu0 0.0
      %434 = vmatmul.mubr.f32.gmra.mrb[0].mxu0 %v202
      %v435 = vpop.f32.mrb[0].mxu0
      %v436 = vadd.f32 %v227, %v435
      %v437 = vpop.f32.mrb[0].mxu0
      %438 = vmatprep.mubr.f32.mxu0 0.0
      %439 = vmatmul.mubr.f32.gmra.mrb[0].mxu0 %v203
      %v440 = vpop.f32.mrb[0].mxu0
      %v441 = vadd.f32 %v227, %v440
      %v442 = vpop.f32.mrb[0].mxu0
      %443 = vmatprep.mubr.f32.mxu0 0.0
      %444 = vmatmul.mubr.f32.gmra.mrb[0].mxu0 %v204
      %v445 = vpop.f32.mrb[0].mxu0
      %v446 = vadd.f32 %v227, %v445
      %v447 = vpop.f32.mrb[0].mxu0
      %448 = vmatprep.mubr.f32.mxu0 0.0
      %449 = vmatmul.mubr.f32.gmra.mrb[0].mxu0 %v205
      %v450 = vpop.f32.mrb[0].mxu0
      %v451 = vadd.f32 %v227, %v450
      %v452 = vpop.f32.mrb[0].mxu0
      %453 = vdwg.mxu0
      %v454 = vmax.f32 %v296, 0.0
      %v455 = vmax.f32 %v301, 0.0
      %v456 = vmax.f32 %v306, 0.0
      %v457 = vmax.f32 %v311, 0.0
      %v458 = vmax.f32 %v316, 0.0
      %v459 = vmax.f32 %v321, 0.0
      %v460 = vmax.f32 %v326, 0.0
      %v461 = vmax.f32 %v331, 0.0
      %v462 = vmax.f32 %v336, 0.0
      %v463 = vmax.f32 %v341, 0.0
      %v464 = vmax.f32 %v346, 0.0
      %v465 = vmax.f32 %v351, 0.0
      %v466 = vmax.f32 %v356, 0.0
      %v467 = vmax.f32 %v361, 0.0
      %v468 = vmax.f32 %v366, 0.0
      %v469 = vmax.f32 %v371, 0.0
      %v470 = vmax.f32 %v376, 0.0
      %v471 = vmax.f32 %v381, 0.0
      %v472 = vmax.f32 %v386, 0.0
      %v473 = vmax.f32 %v391, 0.0
      %v474 = vmax.f32 %v396, 0.0
      %v475 = vmax.f32 %v401, 0.0
      %v476 = vmax.f32 %v406, 0.0
      %v477 = vmax.f32 %v411, 0.0
      %v478 = vmax.f32 %v416, 0.0
      %v479 = vmax.f32 %v421, 0.0
      %v480 = vmax.f32 %v426, 0.0
      %v481 = vmax.f32 %v431, 0.0
      %v482 = vmax.f32 %v436, 0.0
      %v483 = vmax.f32 %v441, 0.0
      %v484 = vmax.f32 %v446, 0.0
      %v485 = vmax.f32 %v451, 0.0
      %486 = vst [vmem:[%s172] sm:$0xff] %v454
      %487 = vst [vmem:[%s172 + $0x8] sm:$0xff] %v455
      %488 = vst [vmem:[%s172 + $0x10] sm:$0xff] %v456
      %489 = vst [vmem:[%s172 + $0x18] sm:$0xff] %v457
      %490 = vst [vmem:[%s172 + $0x20] sm:$0xff] %v458
      %491 = vst [vmem:[%s172 + $0x28] sm:$0xff] %v459
      %492 = vst [vmem:[%s172 + $0x30] sm:$0xff] %v460
      %493 = vst [vmem:[%s172 + $0x38] sm:$0xff] %v461
      %494 = vst [vmem:[%s172 + $0x40] sm:$0xff] %v462
      %495 = vst [vmem:[%s172 + $0x48] sm:$0xff] %v463
      %496 = vst [vmem:[%s172 + $0x50] sm:$0xff] %v464
      %497 = vst [vmem:[%s172 + $0x58] sm:$0xff] %v465
      %498 = vst [vmem:[%s172 + $0x60] sm:$0xff] %v466
      %499 = vst [vmem:[%s172 + $0x68] sm:$0xff] %v467
      %500 = vst [vmem:[%s172 + $0x70] sm:$0xff] %v468
      %501 = vst [vmem:[%s172 + $0x78] sm:$0xff] %v469
      %502 = vst [vmem:[%s172 + $0x80] sm:$0xff] %v470
      %503 = vst [vmem:[%s172 + $0x88] sm:$0xff] %v471
      %504 = vst [vmem:[%s172 + $0x90] sm:$0xff] %v472
      %505 = vst [vmem:[%s172 + $0x98] sm:$0xff] %v473
      %506 = vst [vmem:[%s172 + $0xa0] sm:$0xff] %v474
      %507 = vst [vmem:[%s172 + $0xa8] sm:$0xff] %v475
      %508 = vst [vmem:[%s172 + $0xb0] sm:$0xff] %v476
      %509 = vst [vmem:[%s172 + $0xb8] sm:$0xff] %v477
      %510 = vst [vmem:[%s172 + $0xc0] sm:$0xff] %v478
      %511 = vst [vmem:[%s172 + $0xc8] sm:$0xff] %v479
      %512 = vst [vmem:[%s172 + $0xd0] sm:$0xff] %v480
      %513 = vst [vmem:[%s172 + $0xd8] sm:$0xff] %v481
      %514 = vst [vmem:[%s172 + $0xe0] sm:$0xff] %v482
      %515 = vst [vmem:[%s172 + $0xe8] sm:$0xff] %v483
      %516 = vst [vmem:[%s172 + $0xf0] sm:$0xff] %v484
      %517 = vst [vmem:[%s172 + $0xf8] sm:$0xff] %v485
      %s518 = smul.u32 32, %s14
      %p519 = scmp.lt.s32.totalorder %s518, 63
      %s520 = scalar_select %p519, %s518, 63
      %s521 = smul.addr %s520, 8
      %s522 = scalar_lea.vmem %s3, %s521
      // Predicated region
      $region33: #{conv_bn_relu.1} parent=31 // pred_check
        %p523 = pneg %p100
      $region34: #{conv_bn_relu.1} parent=31 // pred_check_branch
        %525 = sbr.rel (%p523) target = $region36
      $region35: #{conv_bn_relu.1} parent=31 // pred_region
        %s526 = smul.u32 32, %s14
      $region36: #{conv_bn_relu.1} parent=31 // pred_fallthru
        _
    $region32: #{conv_bn_relu.1} parent=5 // pred_fallthru
      _
    %p527 = scmp.le.s32.totalorder 2, %s9
    // Predicated region
    $region37: #{conv_bn_relu.1} parent=5 // pred_check
      %p528 = pneg %p527
    $region38: #{conv_bn_relu.1} parent=5 // pred_check_branch
      %530 = sbr.rel (%p528) target = $region40
    $region39: #{conv_bn_relu.1} parent=5 // pred_region
      %s531 = ssub.s32 %s9, 2
      // Predicated region
      $region41: #{conv_bn_relu.1} parent=39 // pred_check
        %p532 = pneg %p106
      $region42: #{conv_bn_relu.1} parent=39 // pred_check_branch
        %534 = sbr.rel (%p532) target = $region44
      $region43: #{conv_bn_relu.1} parent=39 // pred_region
        %s535 = smul.u32 32, %s15
        %p536 = scmp.lt.s32.totalorder %s535, 63
        %s537 = scalar_select %p536, %s535, 63
        %s538 = smul.addr %s537, 8
        %s539 = scalar_lea.vmem %s3, %s538
      $region44: #{conv_bn_relu.1} parent=39 // pred_fallthru
        _
    $region40: #{conv_bn_relu.1} parent=5 // pred_fallthru
      _
  $region6: #{conv_bn_relu.1} parent=0 // loop_footer
    %s13 = sadd.s32 1, %s9
  $region7: #{conv_bn_relu.1} parent=0 // loop_footer_branch
    %8 = sbr.rel target = $region3
  $region8: #{conv_bn_relu.1} parent=0 // loop_exit
    _

</llo_original>
